<compile_context>
chip_gen: v6e
topology: v6e:2x2x1
jax: 0.10.0
libtpu: 0.0.40
codegen_flags: <defaults>
</compile_context>

<pallas_src>
import functools

import jax
import jax.numpy as jnp
from jax.experimental import pallas as pl
from jax.experimental.pallas import tpu as pltpu

_LANE = 128      # lane width of a vreg
_SUBLANE = 8     # f32 sublanes per vreg


def _round_up(x, m):
    return ((x + m - 1) // m) * m


def _fused_mlp_kernel(*refs, n_hidden, has_out):
    """Fused (Linear -> ReLU)* [+ Linear(., 1)] over one batch tile.

    refs = [x_tile, (W_0, b_0), ..., (W_{n-1}, b_{n-1}), (w_out_row, b_out)?, out_tile]
    """
    x_ref = refs[0]
    o_ref = refs[-1]

    h = x_ref[...]                       # (TM, Din_pad), compute dtype (bf16)
    idx = 1
    for _ in range(n_hidden):
        w = refs[idx][...]               # (Din_pad, Dout_pad), compute dtype
        b = refs[idx + 1][...]           # (1, Dout_pad), f32
        idx += 2
        # MXU matmul in bf16, f32 accumulation; bias + ReLU epilogue in f32.
        h = jnp.dot(h.astype(w.dtype), w, preferred_element_type=jnp.float32)
        h = jnp.maximum(h + b, 0.0)
        # Dropout == identity (inference).

    if has_out:
        # Output Linear has Dout == 1: do a VPU multiply + lane reduction instead of an
        # N=1 MXU matmul (MXU would be 1/256 utilized and the store lane-sparse anyway).
        w_row = refs[idx][...]           # (1, Dlast_pad), f32 (zero in padded lanes)
        b_out = refs[idx + 1][...]       # (1, 1), f32
        o = jnp.sum(h.astype(jnp.float32) * w_row, axis=-1, keepdims=True) + b_out
        o_ref[...] = o.astype(o_ref.dtype)
    else:
        o_ref[...] = h.astype(o_ref.dtype)


class MultiLayerPerceptron1:
    """JAX/Pallas port of the PyTorch MultiLayerPerceptron1 (forward only, eval semantics)."""

    def __init__(self, input_dim, embed_dims, dropout, output_layer=False, *,
                 key=None, compute_dtype=jnp.bfloat16):
        del dropout  # identity at inference
        if key is None:
            key = jax.random.PRNGKey(0)
        self.out_layer = output_layer
        self.compute_dtype = compute_dtype
        self.dims = [input_dim] + list(embed_dims)                 # logical feature dims
        self.pdims = [_round_up(d, _LANE) for d in self.dims]      # lane-padded feature dims

        self.hidden = []   # list of (W_pad (Din_p, Dout_p) compute_dtype, b_pad (1, Dout_p) f32)
        self._raw = []     # unpadded f32 params for the pure-JAX reference
        d_in = input_dim
        for li, d_out in enumerate(embed_dims):
            key, kw, kb = jax.random.split(key, 3)
            bound = 1.0 / float(d_in) ** 0.5
            W = jax.random.uniform(kw, (d_in, d_out), jnp.float32, -bound, bound)
            b = jax.random.uniform(kb, (d_out,), jnp.float32, -bound, bound)
            d_in_p, d_out_p = self.pdims[li], self.pdims[li + 1]
            Wp = jnp.zeros((d_in_p, d_out_p), jnp.float32).at[:d_in, :d_out].set(W)
            bp = jnp.zeros((1, d_out_p), jnp.float32).at[0, :d_out].set(b)
            self.hidden.append((Wp.astype(compute_dtype), bp))
            self._raw.append((W, b))
            d_in = d_out

        if output_layer:
            key, kw, kb = jax.random.split(key, 3)
            bound = 1.0 / float(d_in) ** 0.5
            w_out = jax.random.uniform(kw, (d_in, 1), jnp.float32, -bound, bound)
            b_out = jax.random.uniform(kb, (1,), jnp.float32, -bound, bound)
            d_in_p = self.pdims[-1]
            # Stored as a lane-padded row (1, Dlast_pad) in f32 for the in-kernel VPU reduction.
            self.out_w_row = jnp.zeros((1, d_in_p), jnp.float32).at[0, :d_in].set(w_out[:, 0])
            self.out_b = b_out.reshape(1, 1)
            self._raw_out = (w_out, b_out)

    def __call__(self, x, *, tm=None):
        B, Din = x.shape
        assert Din == self.dims[0], (Din, self.dims[0])
        din_p = self.pdims[0]
        cdt = self.compute_dtype

        # ---- batch tile: multiple of 8 sublanes; weights stay resident so only x/out tiles scale.
        if tm is None:
            tm = min(512, _round_up(B, _SUBLANE))
        tm = _round_up(tm, _SUBLANE)
        b_pad = _round_up(B, tm)
        n_tiles = b_pad // tm

        # Pad batch + lanes with zeros; cast activations to compute dtype (halves DMA bytes).
        xp = jnp.zeros((b_pad, din_p), cdt).at[:B, :Din].set(x.astype(cdt))

        n_hidden = len(self.hidden)
        has_out = self.out_layer
        d_last = self.dims[-1]
        d_last_p = self.pdims[-1]
        out_w = 1 if has_out else d_last_p

        inputs = [xp]
        in_specs = [pl.BlockSpec((tm, din_p), lambda i: (i, 0))]
        for (Wp, bp) in self.hidden:
            inputs += [Wp, bp]
            # Constant block index -> weights/bias stay resident in VMEM across all batch tiles.
            in_specs += [pl.BlockSpec(Wp.shape, lambda i: (0, 0)),
                         pl.BlockSpec(bp.shape, lambda i: (0, 0))]
        if has_out:
            inputs += [self.out_w_row, self.out_b]
            in_specs += [pl.BlockSpec(self.out_w_row.shape, lambda i: (0, 0)),
                         pl.BlockSpec((1, 1), lambda i: (0, 0))]

        out_shape = jax.ShapeDtypeStruct((b_pad, out_w), jnp.float32)
        out_spec = pl.BlockSpec((tm, out_w), lambda i: (i, 0))

        # ---- cost estimate (advisory, logical problem size) ----
        flops = 0
        d_prev = self.dims[0]
        for d in self.dims[1:]:
            flops += 2 * B * d_prev * d
            d_prev = d
        if has_out:
            flops += 2 * B * d_prev
        bytes_accessed = (xp.size * xp.dtype.itemsize
                          + b_pad * out_w * 4
                          + sum(a.size * a.dtype.itemsize for a in inputs[1:]))
        cost = pl.CostEstimate(flops=flops, transcendentals=0, bytes_accessed=bytes_accessed)

        # ---- VMEM budget: weights (resident) + double-buffered x/out tiles + temporaries.
        # Keep well under v7x's 64 MiB physical VMEM.
        weight_bytes = sum(a.size * a.dtype.itemsize for a in inputs[1:])
        io_bytes = 2 * tm * din_p * xp.dtype.itemsize + 2 * tm * out_w * 4
        tmp_bytes = 4 * tm * max(self.pdims) * 4
        vmem_limit = int(min(48 * 2**20, max(16 * 2**20,
                                             2 * (weight_bytes + io_bytes + tmp_bytes))))

        kernel = functools.partial(_fused_mlp_kernel, n_hidden=n_hidden, has_out=has_out)
        y = pl.pallas_call(
            kernel,
            out_shape=out_shape,
            grid=(n_tiles,),
            in_specs=in_specs,
            out_specs=out_spec,
            compiler_params=pltpu.CompilerParams(
                dimension_semantics=("parallel",),     # megacore-shard the batch axis
                vmem_limit_bytes=vmem_limit,
            ),
            cost_estimate=cost,
        )(*inputs)

        if has_out:
            return y[:B, :1]
        return y[:B, :d_last]


def _reference_forward(model, x, *, match_compute_dtype=True):
    """Pure-JAX reference. With match_compute_dtype=True, applies the same bf16 casts as the kernel."""
    cdt = model.compute_dtype if match_compute_dtype else jnp.float32
    h = x
    for W, b in model._raw:
        h = jnp.dot(h.astype(cdt), W.astype(cdt), preferred_element_type=jnp.float32) + b
        h = jnp.maximum(h, 0.0)
    if model.out_layer:
        w_out, b_out = model._raw_out
        h = h @ w_out + b_out
    return h


if __name__ == "__main__":
    key = jax.random.PRNGKey(0)
    k_in, k_model = jax.random.split(key)

    batch, input_dim = 8, 32
    embed_dims = [64, 32]

    x = jax.random.normal(k_in, (batch, input_dim), jnp.float32)

    model = MultiLayerPerceptron1(input_dim, embed_dims, dropout=0.2,
                                  output_layer=True, key=k_model)

    out = jax.block_until_ready(model(x))
    assert out.shape == (batch, 1), out.shape

    # Tight check vs a reference using the same bf16-matmul / f32-accumulate semantics.
    ref_same = _reference_forward(model, x, match_compute_dtype=True)
    assert jnp.allclose(out, ref_same, atol=1e-4, rtol=1e-4), "mismatch vs same-dtype reference"
    # Loose check vs the full-f32 reference (bf16 MXU inputs -> ~0.5% relative deviation budget).
    ref_f32 = _reference_forward(model, x, match_compute_dtype=False)
    assert jnp.allclose(out, ref_f32, atol=5e-2, rtol=5e-2), "mismatch vs f32 reference"

    print("KERNEL_OK")
</pallas_src>

<mosaic_0001>
module attributes {stable_mosaic.version = 11 : i64} {
  func.func @_fused_mlp_kernel(%arg0: i32, %arg1: memref<8x128xbf16, #tpu.memory_space<vmem>>, %arg2: memref<128x128xbf16, #tpu.memory_space<vmem>>, %arg3: memref<1x128xf32, #tpu.memory_space<vmem>>, %arg4: memref<128x128xbf16, #tpu.memory_space<vmem>>, %arg5: memref<1x128xf32, #tpu.memory_space<vmem>>, %arg6: memref<1x128xf32, #tpu.memory_space<vmem>>, %arg7: memref<1x1xf32, #tpu.memory_space<vmem>>, %arg8: memref<8x1xf32, #tpu.memory_space<vmem>>) attributes {dimension_semantics = [#tpu.dimension_semantics<parallel>], iteration_bounds = array<i64: 1>, scalar_prefetch = 0 : i64, scratch_operands = 0 : i64, tpu.core_type = #tpu.core_type<tc>, window_params = [{transform_indices = @transform_0, window_bounds = array<i64: 8, 128>}, {pipeline_mode = #tpu.pipeline_mode<synchronous>, transform_indices = @transform_1, window_bounds = array<i64: 128, 128>}, {pipeline_mode = #tpu.pipeline_mode<synchronous>, transform_indices = @transform_2, window_bounds = array<i64: 1, 128>}, {pipeline_mode = #tpu.pipeline_mode<synchronous>, transform_indices = @transform_3, window_bounds = array<i64: 128, 128>}, {pipeline_mode = #tpu.pipeline_mode<synchronous>, transform_indices = @transform_4, window_bounds = array<i64: 1, 128>}, {pipeline_mode = #tpu.pipeline_mode<synchronous>, transform_indices = @transform_5, window_bounds = array<i64: 1, 128>}, {pipeline_mode = #tpu.pipeline_mode<synchronous>, transform_indices = @transform_6, window_bounds = array<i64: 1, 1>}, {transform_indices = @transform_7, window_bounds = array<i64: 8, 1>}]} {
    %c0 = arith.constant 0 : index
    %c0_0 = arith.constant 0 : index
    %0 = vector.load %arg1[%c0, %c0_0] : memref<8x128xbf16, #tpu.memory_space<vmem>>, vector<8x128xbf16>
    %c0_1 = arith.constant 0 : index
    %c0_2 = arith.constant 0 : index
    %1 = vector.load %arg2[%c0_1, %c0_2] : memref<128x128xbf16, #tpu.memory_space<vmem>>, vector<128x128xbf16>
    %c0_3 = arith.constant 0 : index
    %c0_4 = arith.constant 0 : index
    %2 = vector.load %arg3[%c0_3, %c0_4] : memref<1x128xf32, #tpu.memory_space<vmem>>, vector<1x128xf32>
    %cst = arith.constant dense<0.000000e+00> : vector<8x128xf32>
    %3 = tpu.matmul %0, %1, %cst {dimension_numbers = #tpu.dot_dimension_numbers<[1], [0], [0], [1], [0, 0, 1, 1], [], []>} : vector<8x128xbf16>, vector<128x128xbf16>, vector<8x128xf32> -> vector<8x128xf32>
    %4 = vector.broadcast %2 : vector<1x128xf32> to vector<8x128xf32>
    %5 = arith.addf %3, %4 : vector<8x128xf32>
    %cst_5 = arith.constant 0.000000e+00 : f32
    %6 = vector.broadcast %cst_5 : f32 to vector<8x128xf32>
    %7 = arith.maximumf %5, %6 : vector<8x128xf32>
    %c0_6 = arith.constant 0 : index
    %c0_7 = arith.constant 0 : index
    %8 = vector.load %arg4[%c0_6, %c0_7] : memref<128x128xbf16, #tpu.memory_space<vmem>>, vector<128x128xbf16>
    %c0_8 = arith.constant 0 : index
    %c0_9 = arith.constant 0 : index
    %9 = vector.load %arg5[%c0_8, %c0_9] : memref<1x128xf32, #tpu.memory_space<vmem>>, vector<1x128xf32>
    %10 = arith.truncf %7 : vector<8x128xf32> to vector<8x128xbf16>
    %cst_10 = arith.constant dense<0.000000e+00> : vector<8x128xf32>
    %11 = tpu.matmul %10, %8, %cst_10 {dimension_numbers = #tpu.dot_dimension_numbers<[1], [0], [0], [1], [0, 0, 1, 1], [], []>} : vector<8x128xbf16>, vector<128x128xbf16>, vector<8x128xf32> -> vector<8x128xf32>
    %12 = vector.broadcast %9 : vector<1x128xf32> to vector<8x128xf32>
    %13 = arith.addf %11, %12 : vector<8x128xf32>
    %cst_11 = arith.constant 0.000000e+00 : f32
    %14 = vector.broadcast %cst_11 : f32 to vector<8x128xf32>
    %15 = arith.maximumf %13, %14 : vector<8x128xf32>
    %c0_12 = arith.constant 0 : index
    %c0_13 = arith.constant 0 : index
    %16 = vector.load %arg6[%c0_12, %c0_13] : memref<1x128xf32, #tpu.memory_space<vmem>>, vector<1x128xf32>
    %c0_14 = arith.constant 0 : index
    %c0_15 = arith.constant 0 : index
    %17 = vector.load %arg7[%c0_14, %c0_15] : memref<1x1xf32, #tpu.memory_space<vmem>>, vector<1x1xf32>
    %18 = vector.broadcast %16 : vector<1x128xf32> to vector<8x128xf32>
    %19 = arith.mulf %15, %18 : vector<8x128xf32>
    %cst_16 = arith.constant dense<0.000000e+00> : vector<8xf32>
    %20 = vector.multi_reduction <add>, %19, %cst_16 [1] : vector<8x128xf32> to vector<8xf32>
    %21 = vector.shape_cast %20 : vector<8xf32> to vector<8x1xf32>
    %22 = vector.broadcast %17 : vector<1x1xf32> to vector<8x1xf32>
    %23 = arith.addf %21, %22 : vector<8x1xf32>
    %c0_17 = arith.constant 0 : index
    %c0_18 = arith.constant 0 : index
    %24 = vector.load %arg8[%c0_17, %c0_18] : memref<8x1xf32, #tpu.memory_space<vmem>>, vector<8x1xf32>
    tpu.vector_store %arg8[%c0_17, %c0_18], %23 {strides = array<i32>} : memref<8x1xf32, #tpu.memory_space<vmem>>, vector<8x1xf32>,
    return
  }
  func.func @transform_0(%arg0: i32) -> (i32, i32) {
    %c0_i32 = arith.constant 0 : i32
    %c0_i32_0 = arith.constant 0 : i32
    return %arg0, %c0_i32 : i32, i32
  }
  func.func @transform_1(%arg0: i32) -> (i32, i32) {
    %c0_i32 = arith.constant 0 : i32
    %c0_i32_0 = arith.constant 0 : i32
    %c0_i32_1 = arith.constant 0 : i32
    return %c0_i32, %c0_i32_0 : i32, i32
  }
  func.func @transform_2(%arg0: i32) -> (i32, i32) {
    %c0_i32 = arith.constant 0 : i32
    %c0_i32_0 = arith.constant 0 : i32
    %c0_i32_1 = arith.constant 0 : i32
    return %c0_i32, %c0_i32_0 : i32, i32
  }
  func.func @transform_3(%arg0: i32) -> (i32, i32) {
    %c0_i32 = arith.constant 0 : i32
    %c0_i32_0 = arith.constant 0 : i32
    %c0_i32_1 = arith.constant 0 : i32
    return %c0_i32, %c0_i32_0 : i32, i32
  }
  func.func @transform_4(%arg0: i32) -> (i32, i32) {
    %c0_i32 = arith.constant 0 : i32
    %c0_i32_0 = arith.constant 0 : i32
    %c0_i32_1 = arith.constant 0 : i32
    return %c0_i32, %c0_i32_0 : i32, i32
  }
  func.func @transform_5(%arg0: i32) -> (i32, i32) {
    %c0_i32 = arith.constant 0 : i32
    %c0_i32_0 = arith.constant 0 : i32
    %c0_i32_1 = arith.constant 0 : i32
    return %c0_i32, %c0_i32_0 : i32, i32
  }
  func.func @transform_6(%arg0: i32) -> (i32, i32) {
    %c0_i32 = arith.constant 0 : i32
    %c0_i32_0 = arith.constant 0 : i32
    %c0_i32_1 = arith.constant 0 : i32
    return %c0_i32, %c0_i32_0 : i32, i32
  }
  func.func @transform_7(%arg0: i32) -> (i32, i32) {
    %c0_i32 = arith.constant 0 : i32
    %c0_i32_0 = arith.constant 0 : i32
    return %arg0, %c0_i32 : i32, i32
  }
}

</mosaic_0001>

<llo_original>
// kernel: tpu_custom_call.1
$region0: #{tpu_custom_call.1}
  #allocation0 [shape = 'u32[]', space=smem, size = 0x4, offset = 0x4, fixed_abs, tag = 'smem constant byte address 0x4 - core index']
  #allocation1 [shape = 'u32[144,128]{1,0:T(1,128)}', space=vmem, size = 0x12000, scoped, tag = 'internal scratch']
  #allocation2 [shape = 'f32[1,1]{1,0:T(1,128)S(1)}', space=vmem, size = 0x200, scoped, tag = 'scoped memory for tpu_custom_call.1']
  %s0 = inlined_call_operand.hbm [shape: bf16[8,128], index: 0, kind: input, shape index: {}]
  %s1 = inlined_call_operand.hbm [shape: bf16[128,128], index: 1, kind: input, shape index: {}]
  %s2 = inlined_call_operand.vmem [shape: f32[1,128], index: 2, kind: input, shape index: {}]
  %s3 = inlined_call_operand.hbm [shape: bf16[128,128], index: 3, kind: input, shape index: {}]
  %s4 = inlined_call_operand.vmem [shape: f32[1,128], index: 4, kind: input, shape index: {}]
  %s5 = inlined_call_operand.vmem [shape: f32[1,128], index: 5, kind: input, shape index: {}]
  %s6 = inlined_call_operand.<no memory space> [shape: f32[1,1], index: 6, kind: input, shape index: {}]
  %s7 = inlined_call_operand.vmem [shape: f32[8,1], index: 7, kind: output, shape index: {}]
  %s8 = sld [smem:[#allocation0]]
  $region50: #{tpu_custom_call.1} parent=0
    _
  %s10 = ssub.s32 1, %s8
  %s11 = scalar_select 0, %s10, %s8
  %v12 = vstv %s6
  %13 = vst [vmem:[#allocation2] sm:$0x1] %v12
  $region1: #{tpu_custom_call.1} parent=0
    #allocation3 [shape = 'u8[2048]{0}', space=vmem, size = 0x800, scoped, tag = 'input window, operand 0, single buffered']
    #allocation4 [shape = 's32[1]{0}', space=sflag, size = 0x4, scoped, tag = 'scoped memory for tpu_custom_call.1']
    #allocation5 [shape = 'u8[32768]{0}', space=vmem, size = 0x8000, scoped, tag = 'input window, operand 1, single buffered']
    #allocation6 [shape = 's32[1]{0}', space=sflag, size = 0x4, scoped, tag = 'scoped memory for tpu_custom_call.1']
    #allocation7 [shape = 'u8[32768]{0}', space=vmem, size = 0x8000, scoped, tag = 'input window, operand 3, single buffered']
    %14 = vsyncpa [#allocation4], 0
    %15 = vsyncpa [#allocation6], 0
    // Predicated region
    $region2: #{tpu_custom_call.1} parent=1 // pred_check
      _
    $region3: #{tpu_custom_call.1} parent=1 // pred_check_branch
      %17 = sbr.rel (0) target = $region5
    $region4: #{tpu_custom_call.1} parent=1 // pred_region
      %s19 = ssub.s32 64, 64
      %20 = vsyncadd [#allocation4], %s19
      %s22 = sshll.u32 [#allocation3], 4
      %s23 = int_to_ptr.vmem [resolvable:$true] %s22
      %25 = dma.hbm_to_vmem [thread:$0]  %s0, 64, %s23, [#allocation4]
    $region5: #{tpu_custom_call.1} parent=1 // pred_fallthru
      _
    // Predicated region
    $region6: #{tpu_custom_call.1} parent=1 // pred_check
      _
    $region7: #{tpu_custom_call.1} parent=1 // pred_check_branch
      %27 = sbr.rel (0) target = $region9
    $region8: #{tpu_custom_call.1} parent=1 // pred_region
      %s29 = ssub.s32 1024, 1024
      %30 = vsyncadd [#allocation6], %s29
      %s31 = sshll.u32 [#allocation5], 4
      %s32 = int_to_ptr.vmem [resolvable:$true] %s31
      %37 = dma.hbm_to_vmem [thread:$0]  %s1, 1024, %s32, [#allocation6], 64, 64, 4
    $region9: #{tpu_custom_call.1} parent=1 // pred_fallthru
      _
    // Predicated region
    $region10: #{tpu_custom_call.1} parent=1 // pred_check
      _
    $region11: #{tpu_custom_call.1} parent=1 // pred_check_branch
      %39 = sbr.rel (0) target = $region13
    $region12: #{tpu_custom_call.1} parent=1 // pred_region
      _
    $region13: #{tpu_custom_call.1} parent=1 // pred_fallthru
      _
    // Predicated region
    $region14: #{tpu_custom_call.1} parent=1 // pred_check
      _
    $region15: #{tpu_custom_call.1} parent=1 // pred_check_branch
      %41 = sbr.rel (0) target = $region17
    $region16: #{tpu_custom_call.1} parent=1 // pred_region
      %s43 = ssub.s32 1024, 1024
      %44 = vsyncadd [#allocation6], %s43
      %s45 = sshll.u32 [#allocation7], 4
      %s46 = int_to_ptr.vmem [resolvable:$true] %s45
      %51 = dma.hbm_to_vmem [thread:$0]  %s3, 1024, %s46, [#allocation6], 64, 64, 4
    $region17: #{tpu_custom_call.1} parent=1 // pred_fallthru
      _
    // Predicated region
    $region18: #{tpu_custom_call.1} parent=1 // pred_check
      _
    $region19: #{tpu_custom_call.1} parent=1 // pred_check_branch
      %53 = sbr.rel (0) target = $region21
    $region20: #{tpu_custom_call.1} parent=1 // pred_region
      _
    $region21: #{tpu_custom_call.1} parent=1 // pred_fallthru
      _
    // Predicated region
    $region22: #{tpu_custom_call.1} parent=1 // pred_check
      _
    $region23: #{tpu_custom_call.1} parent=1 // pred_check_branch
      %55 = sbr.rel (0) target = $region25
    $region24: #{tpu_custom_call.1} parent=1 // pred_region
      _
    $region25: #{tpu_custom_call.1} parent=1 // pred_fallthru
      _
    // Predicated region
    $region26: #{tpu_custom_call.1} parent=1 // pred_check
      _
    $region27: #{tpu_custom_call.1} parent=1 // pred_check_branch
      %57 = sbr.rel (0) target = $region29
    $region28: #{tpu_custom_call.1} parent=1 // pred_region
      _
    $region29: #{tpu_custom_call.1} parent=1 // pred_fallthru
      _
    // Predicated region
    $region30: #{tpu_custom_call.1} parent=1 // pred_check
      _
    $region31: #{tpu_custom_call.1} parent=1 // pred_check_branch
      %59 = sbr.rel (0) target = $region33
    $region32: #{tpu_custom_call.1} parent=1 // pred_region
      %60 = dma.done [#allocation4], 64
    $region33: #{tpu_custom_call.1} parent=1 // pred_fallthru
      _
    // Predicated region
    $region34: #{tpu_custom_call.1} parent=1 // pred_check
      _
    $region35: #{tpu_custom_call.1} parent=1 // pred_check_branch
      %62 = sbr.rel (0) target = $region37
    $region36: #{tpu_custom_call.1} parent=1 // pred_region
      %63 = dma.done [#allocation6], 1024
    $region37: #{tpu_custom_call.1} parent=1 // pred_fallthru
      _
    // Predicated region
    $region38: #{tpu_custom_call.1} parent=1 // pred_check
      _
    $region39: #{tpu_custom_call.1} parent=1 // pred_check_branch
      %65 = sbr.rel (0) target = $region41
    $region40: #{tpu_custom_call.1} parent=1 // pred_region
      %66 = dma.done [#allocation6], 1024
    $region41: #{tpu_custom_call.1} parent=1 // pred_fallthru
      _
    %v68 = vld [vmem:[#allocation3] sm:$0xf]
    %v69 = vld [vmem:[#allocation5] sm:$0xf]
    %v70 = vld [vmem:[#allocation5 + $0x4] sm:$0xf]
    %v71 = vld [vmem:[#allocation5 + $0x8] sm:$0xf]
    %v72 = vld [vmem:[#allocation5 + $0xc] sm:$0xf]
    %v73 = vld [vmem:[#allocation5 + $0x10] sm:$0xf]
    %v74 = vld [vmem:[#allocation5 + $0x14] sm:$0xf]
    %v75 = vld [vmem:[#allocation5 + $0x18] sm:$0xf]
    %v76 = vld [vmem:[#allocation5 + $0x1c] sm:$0xf]
    %v77 = vld [vmem:[#allocation5 + $0x20] sm:$0xf]
    %v78 = vld [vmem:[#allocation5 + $0x24] sm:$0xf]
    %v79 = vld [vmem:[#allocation5 + $0x28] sm:$0xf]
    %v80 = vld [vmem:[#allocation5 + $0x2c] sm:$0xf]
    %v81 = vld [vmem:[#allocation5 + $0x30] sm:$0xf]
    %v82 = vld [vmem:[#allocation5 + $0x34] sm:$0xf]
    %v83 = vld [vmem:[#allocation5 + $0x38] sm:$0xf]
    %v84 = vld [vmem:[#allocation5 + $0x3c] sm:$0xf]
    %v85 = vld [vmem:[%s2] sm:$0x1]
    %v87 = vlaneseq
    %v88 = vshrl.u32 %v87, 7
    %v89 = vsub.s32 0, %v88
    %v90 = vrot.slane %v85, %v89
    %v108 = vunpack.c.l.b16 %v69
    %v109 = vunpack.c.l.b16 %v70
    %v110 = vunpack.c.l.b16 %v71
    %v111 = vunpack.c.l.b16 %v72
    %v112 = vunpack.c.l.b16 %v73
    %v113 = vunpack.c.l.b16 %v74
    %v114 = vunpack.c.l.b16 %v75
    %v115 = vunpack.c.l.b16 %v76
    %v116 = vunpack.c.l.b16 %v77
    %v117 = vunpack.c.l.b16 %v78
    %v118 = vunpack.c.l.b16 %v79
    %v119 = vunpack.c.l.b16 %v80
    %v120 = vunpack.c.l.b16 %v81
    %v121 = vunpack.c.l.b16 %v82
    %v122 = vunpack.c.l.b16 %v83
    %v123 = vunpack.c.l.b16 %v84
    %v124 = vpack.c.b16 %v109, %v108
    %v125 = vpack.c.b16 %v111, %v110
    %v126 = vpack.c.b16 %v113, %v112
    %v127 = vpack.c.b16 %v115, %v114
    %v128 = vpack.c.b16 %v117, %v116
    %v129 = vpack.c.b16 %v119, %v118
    %v130 = vpack.c.b16 %v121, %v120
    %v131 = vpack.c.b16 %v123, %v122
    %140 = vmatprep.subr.bf16.mxu0 0
    %141 = vmatpush1.bf16.msra.mxu0 %v131
    %142 = vmatprep.subr.bf16.mxu0 0
    %143 = vmatpush1.bf16.msra.mxu0 %v130
    %144 = vmatprep.subr.bf16.mxu0 0
    %145 = vmatpush1.bf16.msra.mxu0 %v129
    %146 = vmatprep.subr.bf16.mxu0 0
    %147 = vmatpush1.bf16.msra.mxu0 %v128
    %148 = vmatprep.subr.bf16.mxu0 0
    %149 = vmatpush1.bf16.msra.mxu0 %v127
    %150 = vmatprep.subr.bf16.mxu0 0
    %151 = vmatpush1.bf16.msra.mxu0 %v126
    %152 = vmatprep.subr.bf16.mxu0 0
    %153 = vmatpush1.bf16.msra.mxu0 %v125
    %154 = vmatprep.subr.bf16.mxu0 0
    %155 = vmatpush1.bf16.msra.mxu0 %v124
    %156 = vmatprep.subr.bf16.mxu0 0
    %157 = vmatpush2.bf16.msra.mxu0 0
    %158 = vmatprep.subr.bf16.mxu0 0
    %159 = vmatpush2.bf16.msra.mxu0 0
    %160 = vmatprep.subr.bf16.mxu0 0
    %161 = vmatpush2.bf16.msra.mxu0 0
    %162 = vmatprep.subr.bf16.mxu0 0
    %163 = vmatpush2.bf16.msra.mxu0 0
    %164 = vmatprep.subr.bf16.mxu0 0
    %165 = vmatpush2.bf16.msra.mxu0 0
    %166 = vmatprep.subr.bf16.mxu0 0
    %167 = vmatpush2.bf16.msra.mxu0 0
    %168 = vmatprep.subr.bf16.mxu0 0
    %169 = vmatpush2.bf16.msra.mxu0 0
    %170 = vmatprep.subr.bf16.mxu0 0
    %171 = vmatpush2.bf16.msra.mxu0 0
    %172 = vmatprep.mubr.bf16.mxu0 0
    %173 = vmatmul.mubr.bf16.gmra.mxu0 %v68
    %v174 = vpop.f32.mrf.mxu0
    %v175 = vadd.f32 %v90, %v174
    %v176 = vpop.f32.mrf.mxu0
    %v177 = vpop.f32.mrf.mxu0
    %v178 = vpop.f32.mrf.mxu0
    %179 = vdwg.mxu0
    %v180 = vmax.f32 %v175, 0.0
    %v181 = vld [vmem:[#allocation7] sm:$0xf]
    %v182 = vld [vmem:[#allocation7 + $0x4] sm:$0xf]
    %v183 = vld [vmem:[#allocation7 + $0x8] sm:$0xf]
    %v184 = vld [vmem:[#allocation7 + $0xc] sm:$0xf]
    %v185 = vld [vmem:[#allocation7 + $0x10] sm:$0xf]
    %v186 = vld [vmem:[#allocation7 + $0x14] sm:$0xf]
    %v187 = vld [vmem:[#allocation7 + $0x18] sm:$0xf]
    %v188 = vld [vmem:[#allocation7 + $0x1c] sm:$0xf]
    %v189 = vld [vmem:[#allocation7 + $0x20] sm:$0xf]
    %v190 = vld [vmem:[#allocation7 + $0x24] sm:$0xf]
    %v191 = vld [vmem:[#allocation7 + $0x28] sm:$0xf]
    %v192 = vld [vmem:[#allocation7 + $0x2c] sm:$0xf]
    %v193 = vld [vmem:[#allocation7 + $0x30] sm:$0xf]
    %v194 = vld [vmem:[#allocation7 + $0x34] sm:$0xf]
    %v195 = vld [vmem:[#allocation7 + $0x38] sm:$0xf]
    %v196 = vld [vmem:[#allocation7 + $0x3c] sm:$0xf]
    %v197 = vld [vmem:[%s4] sm:$0x1]
    %v198 = vpack.c.bf16 %v180, %v180
    %v200 = vlaneseq
    %v201 = vshrl.u32 %v200, 7
    %v202 = vsub.s32 0, %v201
    %v203 = vrot.slane %v197, %v202
    %v221 = vunpack.c.l.b16 %v181
    %v222 = vunpack.c.l.b16 %v182
    %v223 = vunpack.c.l.b16 %v183
    %v224 = vunpack.c.l.b16 %v184
    %v225 = vunpack.c.l.b16 %v185
    %v226 = vunpack.c.l.b16 %v186
    %v227 = vunpack.c.l.b16 %v187
    %v228 = vunpack.c.l.b16 %v188
    %v229 = vunpack.c.l.b16 %v189
    %v230 = vunpack.c.l.b16 %v190
    %v231 = vunpack.c.l.b16 %v191
    %v232 = vunpack.c.l.b16 %v192
    %v233 = vunpack.c.l.b16 %v193
    %v234 = vunpack.c.l.b16 %v194
    %v235 = vunpack.c.l.b16 %v195
    %v236 = vunpack.c.l.b16 %v196
    %v237 = vpack.c.b16 %v222, %v221
    %v238 = vpack.c.b16 %v224, %v223
    %v239 = vpack.c.b16 %v226, %v225
    %v240 = vpack.c.b16 %v228, %v227
    %v241 = vpack.c.b16 %v230, %v229
    %v242 = vpack.c.b16 %v232, %v231
    %v243 = vpack.c.b16 %v234, %v233
    %v244 = vpack.c.b16 %v236, %v235
    %253 = vmatprep.subr.bf16.mxu0 0
    %254 = vmatpush1.bf16.msra.mxu0 %v244
    %255 = vmatprep.subr.bf16.mxu0 0
    %256 = vmatpush1.bf16.msra.mxu0 %v243
    %257 = vmatprep.subr.bf16.mxu0 0
    %258 = vmatpush1.bf16.msra.mxu0 %v242
    %259 = vmatprep.subr.bf16.mxu0 0
    %260 = vmatpush1.bf16.msra.mxu0 %v241
    %261 = vmatprep.subr.bf16.mxu0 0
    %262 = vmatpush1.bf16.msra.mxu0 %v240
    %263 = vmatprep.subr.bf16.mxu0 0
    %264 = vmatpush1.bf16.msra.mxu0 %v239
    %265 = vmatprep.subr.bf16.mxu0 0
    %266 = vmatpush1.bf16.msra.mxu0 %v238
    %267 = vmatprep.subr.bf16.mxu0 0
    %268 = vmatpush1.bf16.msra.mxu0 %v237
    %269 = vmatprep.subr.bf16.mxu0 0
    %270 = vmatpush2.bf16.msra.mxu0 0
    %271 = vmatprep.subr.bf16.mxu0 0
    %272 = vmatpush2.bf16.msra.mxu0 0
    %273 = vmatprep.subr.bf16.mxu0 0
    %274 = vmatpush2.bf16.msra.mxu0 0
    %275 = vmatprep.subr.bf16.mxu0 0
    %276 = vmatpush2.bf16.msra.mxu0 0
    %277 = vmatprep.subr.bf16.mxu0 0
    %278 = vmatpush2.bf16.msra.mxu0 0
    %279 = vmatprep.subr.bf16.mxu0 0
    %280 = vmatpush2.bf16.msra.mxu0 0
    %281 = vmatprep.subr.bf16.mxu0 0
    %282 = vmatpush2.bf16.msra.mxu0 0
    %283 = vmatprep.subr.bf16.mxu0 0
    %284 = vmatpush2.bf16.msra.mxu0 0
    %285 = vmatprep.mubr.bf16.mxu0 0
    %286 = vmatmul.mubr.bf16.gmra.mxu0 %v198
    %v287 = vpop.f32.mrf.mxu0
    %v288 = vadd.f32 %v203, %v287
    %v289 = vpop.f32.mrf.mxu0
    %v290 = vpop.f32.mrf.mxu0
    %v291 = vpop.f32.mrf.mxu0
    %292 = vdwg.mxu0
    %v293 = vmax.f32 %v288, 0.0
    %v294 = vld [vmem:[%s5] sm:$0x1]
    %v295 = vld [vmem:[#allocation2] sm:$0x1]
    %v297 = vlaneseq
    %v298 = vshrl.u32 %v297, 7
    %v299 = vsub.s32 0, %v298
    %v300 = vrot.slane %v294, %v299
    %v302 = vmul.f32 %v293, %v300
    %303 = vadd.xlane.f32.xlu0 %v302
    %v304 = vpop.xlane.xlu0 %303
    %v306 = vlaneseq
    %v307 = vshrl.u32 %v306, 7
    %v308 = vsub.s32 0, %v307
    %v309 = vrot.slane %v295, %v308
    %v311 = vadd.f32 %v304, %v309
    %vm312 = vcmask 7168
    %313 = vst.msk [vmem:[%s7] sm:$0xff] %vm312, %v311
    // Predicated region
    $region42: #{tpu_custom_call.1} parent=1 // pred_check
      _
    $region43: #{tpu_custom_call.1} parent=1 // pred_check_branch
      %315 = sbr.rel (0) target = $region45
    $region44: #{tpu_custom_call.1} parent=1 // pred_region
      _
    $region45: #{tpu_custom_call.1} parent=1 // pred_fallthru
      _
    // Predicated region
    $region46: #{tpu_custom_call.1} parent=1 // pred_check
      _
    $region47: #{tpu_custom_call.1} parent=1 // pred_check_branch
      %317 = sbr.rel (0) target = $region49
    $region48: #{tpu_custom_call.1} parent=1 // pred_region
      _
    $region49: #{tpu_custom_call.1} parent=1 // pred_fallthru
      _
    %318 = vsyncpa [#allocation4], 1
    %319 = vsyncpa [#allocation6], 1

</llo_original>
